<compile_context>
chip_gen: v5e
topology: v5e:2x2
jax: 0.10.0
libtpu: 0.0.40
codegen_flags: <defaults>
</compile_context>

<pallas_src>
import functools
import numpy as np
import jax
import jax.numpy as jnp
from jax.experimental import pallas as pl
from jax.experimental.pallas import tpu as pltpu

EPS = 1e-5     # BatchNorm eps (PyTorch default)
SLOPE = 1e-5   # LeakyReLU negative slope used by the module


def _round_up(x, m):
    return (x + m - 1) // m * m


# ----------------------------- Pallas kernels -----------------------------

def _leaky(y):
    return jnp.where(y >= 0, y, y * SLOPE)


def _mm_kernel(a_ref, b_ref, bias_ref, o_ref, *, act):
    y = jnp.dot(a_ref[...], b_ref[...], preferred_element_type=jnp.float32)
    y = y + bias_ref[...]
    if act == "leaky":
        y = _leaky(y)
    o_ref[...] = y.astype(o_ref.dtype)


def _mm_res_kernel(a_ref, b_ref, bias_ref, r_ref, o_ref, *, act):
    y = jnp.dot(a_ref[...], b_ref[...], preferred_element_type=jnp.float32)
    y = y + bias_ref[...] + r_ref[...]
    if act == "leaky":
        y = _leaky(y)
    o_ref[...] = y.astype(o_ref.dtype)


def _bn_stats_kernel(x_ref, s_ref):
    # Pass 1: per-channel sum and sum-of-squares, accumulated across M tiles.
    @pl.when(pl.program_id(0) == 0)
    def _():
        s_ref[...] = jnp.zeros_like(s_ref)

    x = x_ref[...].astype(jnp.float32)
    s_ref[...] += jnp.concatenate(
        [jnp.sum(x, axis=0, keepdims=True),
         jnp.sum(x * x, axis=0, keepdims=True)], axis=0)


def _bn_apply_kernel(x_ref, s_ref, g_ref, b_ref, o_ref, *, inv_m, relu):
    # Pass 2: normalize tile-by-tile (training-mode batch stats) + optional LeakyReLU.
    x = x_ref[...].astype(jnp.float32)
    s = s_ref[...]
    mean = s[0:1, :] * inv_m
    var = s[1:2, :] * inv_m - mean * mean
    y = (x - mean) * jax.lax.rsqrt(var + EPS) * g_ref[...] + b_ref[...]
    if relu:
        y = _leaky(y)
    o_ref[...] = y


def _gmean_kernel(x_ref, o_ref, *, inv_m):
    @pl.when(pl.program_id(1) == 0)
    def _():
        o_ref[...] = jnp.zeros_like(o_ref)
    o_ref[...] += jnp.sum(x_ref[...].astype(jnp.float32), axis=1, keepdims=True) * inv_m


def _cab_kernel(x_ref, y_ref, a_ref, o_ref):
    o_ref[...] = x_ref[...] * a_ref[...] + y_ref[...]


# ----------------------------- kernel wrappers -----------------------------

def matmul_bias(a, b, bias, *, act=None, residual=None):
    """(M,K) @ (K,N) + bias [+ residual] [+ LeakyReLU] via tiled Pallas MXU matmul.

    Full-K resident weight block; bf16 inputs, f32 accumulate; bias/act/residual fused.
    """
    M, K = a.shape
    Kb, Nc = b.shape
    assert Kb == K
    Np = _round_up(Nc, 128)

    # tm: 1024 on large-M / moderate-K layers, 512 otherwise (keeps the K=5184
    # SegHead path within the v7x VMEM budget), capped by M.
    tm = 1024 if (K <= 2048 and M >= 2048) else 512
    tm = min(tm, max(_round_up(M, 8), 8))
    Mp = _round_up(M, tm)

    ap = a.astype(jnp.bfloat16)
    if Mp != M:
        ap = jnp.pad(ap, ((0, Mp - M), (0, 0)))
    bp = b.astype(jnp.bfloat16)
    if Np != Nc:
        bp = jnp.pad(bp, ((0, 0), (0, Np - Nc)))
    biasp = jnp.pad(bias.astype(jnp.float32), (0, Np - Nc)).reshape(1, Np)

    in_arrays = [ap, bp, biasp]
    in_specs = [pl.BlockSpec((tm, K), lambda i: (i, 0)),
                pl.BlockSpec((K, Np), lambda i: (0, 0)),   # resident weights (constant idx)
                pl.BlockSpec((1, Np), lambda i: (0, 0))]
    if residual is not None:
        rp = jnp.pad(residual.astype(jnp.float32), ((0, Mp - M), (0, Np - Nc)))
        in_arrays.append(rp)
        in_specs.append(pl.BlockSpec((tm, Np), lambda i: (i, 0)))
        kern = functools.partial(_mm_res_kernel, act=act)
    else:
        kern = functools.partial(_mm_kernel, act=act)

    out = pl.pallas_call(
        kern,
        out_shape=jax.ShapeDtypeStruct((Mp, Np), jnp.float32),
        grid=(Mp // tm,),
        in_specs=in_specs,
        out_specs=pl.BlockSpec((tm, Np), lambda i: (i, 0)),
        compiler_params=pltpu.CompilerParams(
            dimension_semantics=("parallel",),
            vmem_limit_bytes=48 * 1024 * 1024),
    )(*in_arrays)
    return out[:M, :Nc]


def batchnorm_act(x, p, relu=True):
    """Training-mode BatchNorm3d (batch stats) + optional LeakyReLU(1e-5).

    Two-pass tiled reduction: pass 1 accumulates per-channel sum / sumsq; pass 2
    normalizes tile-by-tile. Zero-padded rows contribute 0 to both sums and are
    discarded on the way out.
    """
    shp = x.shape
    C = shp[-1]
    M = int(np.prod(shp[:-1]))
    tm = min(512, _round_up(M, 8))
    Mp = _round_up(M, tm)
    x2 = x.reshape(M, C).astype(jnp.float32)
    if Mp != M:
        x2 = jnp.pad(x2, ((0, Mp - M), (0, 0)))
    nt = Mp // tm

    stats = pl.pallas_call(
        _bn_stats_kernel,
        out_shape=jax.ShapeDtypeStruct((2, C), jnp.float32),
        grid=(nt,),
        in_specs=[pl.BlockSpec((tm, C), lambda i: (i, 0))],
        out_specs=pl.BlockSpec((2, C), lambda i: (0, 0)),
        compiler_params=pltpu.CompilerParams(dimension_semantics=("arbitrary",)),
    )(x2)

    out = pl.pallas_call(
        functools.partial(_bn_apply_kernel, inv_m=1.0 / M, relu=relu),
        out_shape=jax.ShapeDtypeStruct((Mp, C), jnp.float32),
        grid=(nt,),
        in_specs=[pl.BlockSpec((tm, C), lambda i: (i, 0)),
                  pl.BlockSpec((2, C), lambda i: (0, 0)),
                  pl.BlockSpec((1, C), lambda i: (0, 0)),
                  pl.BlockSpec((1, C), lambda i: (0, 0))],
        out_specs=pl.BlockSpec((tm, C), lambda i: (i, 0)),
        compiler_params=pltpu.CompilerParams(dimension_semantics=("parallel",)),
    )(x2, stats, p["g"].reshape(1, C), p["b"].reshape(1, C))
    return out[:M].reshape(shp)


def global_mean(x):
    """x: (N, D, H, W, C) -> per-channel mean over spatial dims, shape (N, C)."""
    N, C = x.shape[0], x.shape[-1]
    M = int(np.prod(x.shape[1:-1]))
    tm = min(512, _round_up(M, 8))
    Mp = _round_up(M, tm)
    x3 = x.reshape(N, M, C)
    if Mp != M:
        x3 = jnp.pad(x3, ((0, 0), (0, Mp - M), (0, 0)))
    nt = Mp // tm
    out = pl.pallas_call(
        functools.partial(_gmean_kernel, inv_m=1.0 / M),
        out_shape=jax.ShapeDtypeStruct((N, 1, C), jnp.float32),
        grid=(N, nt),
        in_specs=[pl.BlockSpec((1, tm, C), lambda n, m: (n, m, 0))],
        out_specs=pl.BlockSpec((1, 1, C), lambda n, m: (n, 0, 0)),
        compiler_params=pltpu.CompilerParams(
            dimension_semantics=("parallel", "arbitrary")),
    )(x3)
    return out.reshape(N, C)


def cab_combine(x, y, att):
    """out = x * att (broadcast over spatial) + y, tiled over rows."""
    N, D, H, W, C = x.shape
    M = D * H * W
    tm = min(512, _round_up(M, 8))
    Mp = _round_up(M, tm)
    x3 = x.reshape(N, M, C)
    y3 = y.reshape(N, M, C)
    if Mp != M:
        x3 = jnp.pad(x3, ((0, 0), (0, Mp - M), (0, 0)))
        y3 = jnp.pad(y3, ((0, 0), (0, Mp - M), (0, 0)))
    out = pl.pallas_call(
        _cab_kernel,
        out_shape=jax.ShapeDtypeStruct((N, Mp, C), jnp.float32),
        grid=(N, Mp // tm),
        in_specs=[pl.BlockSpec((1, tm, C), lambda n, m: (n, m, 0)),
                  pl.BlockSpec((1, tm, C), lambda n, m: (n, m, 0)),
                  pl.BlockSpec((1, 1, C), lambda n, m: (n, 0, 0))],
        out_specs=pl.BlockSpec((1, tm, C), lambda n, m: (n, m, 0)),
        compiler_params=pltpu.CompilerParams(
            dimension_semantics=("parallel", "parallel")),
    )(x3, y3, att.reshape(N, 1, C))
    return out[:, :M].reshape(x.shape)


# ----------------------------- conv lowerings -----------------------------

def conv3d(x, p, *, stride=1, padding=0, act=None, residual=None):
    """Conv3d lowered to bf16 im2col + Pallas MXU matmul with fused bias/act/residual."""
    w, b = p["w"], p["b"]                    # w: (Cout, Cin, kd, kh, kw) (torch layout)
    N, D, H, W, Cin = x.shape
    Cout, _, kd, kh, kw = w.shape
    s, pd = stride, padding
    xp = x.astype(jnp.bfloat16)              # bf16 patches: halves im2col HBM footprint
    if pd:
        xp = jnp.pad(xp, ((0, 0), (pd, pd), (pd, pd), (pd, pd), (0, 0)))
    Do = (D + 2 * pd - kd) // s + 1
    Ho = (H + 2 * pd - kh) // s + 1
    Wo = (W + 2 * pd - kw) // s + 1
    # TODO(synk): stream the kd*kh*kw taps from the original NDHWC tensor inside the
    # matmul kernel (element-offset windows / manual DMA) instead of materializing the
    # duplicated im2col matrix in HBM.
    cols = []
    for a in range(kd):
        for bb in range(kh):
            for c in range(kw):
                cols.append(xp[:, a:a + (Do - 1) * s + 1:s,
                               bb:bb + (Ho - 1) * s + 1:s,
                               c:c + (Wo - 1) * s + 1:s, :])
    patches = jnp.stack(cols, axis=4)                          # (N, Do, Ho, Wo, K3, Cin)
    a2 = patches.reshape(N * Do * Ho * Wo, kd * kh * kw * Cin)
    w2 = jnp.transpose(w, (2, 3, 4, 1, 0)).reshape(kd * kh * kw * Cin, Cout)
    res2 = None if residual is None else residual.reshape(N * Do * Ho * Wo, Cout)
    y = matmul_bias(a2, w2, b, act=act, residual=res2)
    return y.reshape(N, Do, Ho, Wo, Cout)


def conv_transpose3d_s2(x, p):
    """ConvTranspose3d(C, C, kernel=2, stride=2, padding=0) == matmul + depth-to-space."""
    w, b = p["w"], p["b"]                    # w: (Cin, Cout, 2, 2, 2) (torch layout)
    N, D, H, W, Cin = x.shape
    Cout = w.shape[1]
    w2 = jnp.transpose(w, (0, 2, 3, 4, 1)).reshape(Cin, 8 * Cout)
    bias_cols = jnp.tile(b, 8)
    y = matmul_bias(x.reshape(N * D * H * W, Cin), w2, bias_cols)
    # TODO(synk): write the interleaved (2x2x2) layout directly via a layout-aware
    # out_spec instead of this XLA depth-to-space transpose.
    y = y.reshape(N, D, H, W, 2, 2, 2, Cout)
    y = jnp.transpose(y, (0, 1, 4, 2, 5, 3, 6, 7)).reshape(N, 2 * D, 2 * H, 2 * W, Cout)
    return y


def conv1x1_small(x, p):
    """Tiny 1x1x1 conv (e.g. Cout=2 classifier) kept in XLA per perf feedback."""
    w, b = p["w"], p["b"]                    # (Cout, Cin, 1, 1, 1)
    Cout, Cin = w.shape[0], w.shape[1]
    return jnp.einsum("ndhwc,oc->ndhwo", x, w.reshape(Cout, Cin)) + b


def nearest_upsample(x, s):
    x = jnp.repeat(x, s, axis=1)
    x = jnp.repeat(x, s, axis=2)
    x = jnp.repeat(x, s, axis=3)
    return x


# ----------------------------- parameter init -----------------------------

class KeyGen:
    def __init__(self, key):
        self.key = key

    def __call__(self):
        self.key, sub = jax.random.split(self.key)
        return sub


def _conv3d_init(key, cin, cout, k):
    kw, kb = jax.random.split(key)
    fan_in = cin * k * k * k
    w = jax.random.normal(kw, (cout, cin, k, k, k), jnp.float32) * np.sqrt(2.0 / fan_in)
    bound = 1.0 / np.sqrt(fan_in)
    b = jax.random.uniform(kb, (cout,), jnp.float32, -bound, bound)
    return {"w": w, "b": b}


def _convT3d_init(key, cin, cout, k):
    kw, kb = jax.random.split(key)
    fan_in = cin * k * k * k
    w = jax.random.normal(kw, (cin, cout, k, k, k), jnp.float32) * np.sqrt(1.0 / fan_in)
    bound = 1.0 / np.sqrt(fan_in)
    b = jax.random.uniform(kb, (cout,), jnp.float32, -bound, bound)
    return {"w": w, "b": b}


def _bn_init(c):
    return {"g": jnp.ones((c,), jnp.float32), "b": jnp.zeros((c,), jnp.float32)}


# ----------------------------- sub-modules -----------------------------

def voxres_init(kg, c):
    return {"bn": _bn_init(c), "conv": _conv3d_init(kg(), c, c, 3)}


def voxres_fwd(p, x):
    # TODO(synk): VoxRes source not included in reference; assumed VoxResNet block:
    # x + Conv3d(c,c,3,1,1)(LeakyReLU(BN(x))).  Residual add fused into the conv matmul.
    h = batchnorm_act(x, p["bn"], relu=True)
    return conv3d(h, p["conv"], stride=1, padding=1, residual=x)


def rrb_init(kg, c):
    return {"c1": _conv3d_init(kg(), c, c, 1),
            "c2": _conv3d_init(kg(), c, c, 3),
            "bn": _bn_init(c),
            "c3": _conv3d_init(kg(), c, c, 3)}


def rrb_fwd(p, x):
    # TODO(synk): RRB source not included; assumed DFN refinement-residual block:
    # h = 1x1 conv; out = act(h + conv3(act(BN(conv2(h))))).  Residual+act fused.
    h = conv3d(x, p["c1"], stride=1, padding=0)
    r = conv3d(h, p["c2"], stride=1, padding=1)
    r = batchnorm_act(r, p["bn"], relu=True)
    return conv3d(r, p["c3"], stride=1, padding=1, act="leaky", residual=h)


def cab_init(kg, cin, cout):
    return {"c1": _conv3d_init(kg(), 2 * cin, cout, 1),
            "c2": _conv3d_init(kg(), cout, cout, 1)}


def cab_fwd(p, x, y):
    # TODO(synk): CAB source not included; assumed DFN channel-attention block:
    # att = sigmoid(conv2(act(conv1(globalpool(cat[x, y]))))); out = x * att + y.
    # Global pool of the concat == concat of pools (mean is linear), so the big concat
    # tensor is never materialized. The two GEMMs have only batch(=2) rows -> XLA.
    g = jnp.concatenate([global_mean(x), global_mean(y)], axis=-1)      # (N, 2C)
    w1, b1 = p["c1"]["w"], p["c1"]["b"]
    w2, b2 = p["c2"]["w"], p["c2"]["b"]
    h = g @ w1.reshape(w1.shape[0], w1.shape[1]).T + b1
    h = jnp.where(h >= 0, h, h * SLOPE)
    att = jax.nn.sigmoid(h @ w2.reshape(w2.shape[0], w2.shape[1]).T + b2)
    return cab_combine(x, y, att)


# ----------------------------- VoxCABHead -----------------------------

def voxcab_init(kg, in_dims):
    return {
        "conv_1a": _conv3d_init(kg(), in_dims, 32, 3), "bn_1a": _bn_init(32),
        "conv_1b": _conv3d_init(kg(), 32, 32, 3), "bn_1b": _bn_init(32),
        "conv_1c": _conv3d_init(kg(), 32, 64, 3),
        "res_2": voxres_init(kg, 64), "res_3": voxres_init(kg, 64),
        "bn_3": _bn_init(64),
        "conv_4": _conv3d_init(kg(), 64, 64, 3),
        "res_5": voxres_init(kg, 64), "res_6": voxres_init(kg, 64),
        "bn_6": _bn_init(64),
        "conv_7": _conv3d_init(kg(), 64, 64, 3),
        "res_8": voxres_init(kg, 64), "res_9": voxres_init(kg, 64),
        "rrb_0_0": rrb_init(kg, 64), "cab_0": cab_init(kg, 64, 64),
        "rrb_0_1": rrb_init(kg, 64), "up_0": _convT3d_init(kg(), 64, 64, 2),
        "rrb_1_0": rrb_init(kg, 64), "cab_1": cab_init(kg, 64, 64),
        "rrb_1_1": rrb_init(kg, 64), "up_1_0": _convT3d_init(kg(), 64, 64, 2),
        "rrb_2_0": rrb_init(kg, 64), "cab_2": cab_init(kg, 64, 64),
        "rrb_2_1": rrb_init(kg, 64), "up_2_0": _convT3d_init(kg(), 64, 64, 2),
    }


def voxcab_fwd(p, x):
    x = conv3d(x, p["conv_1a"], stride=1, padding=1)
    x = batchnorm_act(x, p["bn_1a"], relu=True)
    x = conv3d(x, p["conv_1b"], stride=1, padding=1)
    x = batchnorm_act(x, p["bn_1b"], relu=True)
    x = conv3d(x, p["conv_1c"], stride=2, padding=1)
    x = voxres_fwd(p["res_2"], x)
    x = voxres_fwd(p["res_3"], x)
    rrb_0_0 = rrb_fwd(p["rrb_0_0"], x)
    x = batchnorm_act(x, p["bn_3"], relu=True)
    x = conv3d(x, p["conv_4"], stride=2, padding=1)
    x = voxres_fwd(p["res_5"], x)
    x = voxres_fwd(p["res_6"], x)
    rrb_1_0 = rrb_fwd(p["rrb_1_0"], x)
    x = batchnorm_act(x, p["bn_6"], relu=True)
    x = conv3d(x, p["conv_7"], stride=2, padding=1)
    x = voxres_fwd(p["res_8"], x)
    x = voxres_fwd(p["res_9"], x)

    gf_vec = global_mean(x)                                            # (N, 64)
    gf = jnp.broadcast_to(gf_vec[:, None, None, None, :], x.shape)

    rrb_2_0 = rrb_fwd(p["rrb_2_0"], x)
    rrb_2_0 = cab_fwd(p["cab_2"], rrb_2_0, gf)
    rrb_2_1 = rrb_fwd(p["rrb_2_1"], rrb_2_0)
    rrb_2 = conv_transpose3d_s2(rrb_2_1, p["up_2_0"])

    rrb_1_0 = cab_fwd(p["cab_1"], rrb_1_0, rrb_2)
    rrb_1_1 = rrb_fwd(p["rrb_1_1"], rrb_1_0)
    rrb_1 = conv_transpose3d_s2(rrb_1_1, p["up_1_0"])

    rrb_0_0 = cab_fwd(p["cab_0"], rrb_0_0, rrb_1)
    rrb_0_1 = rrb_fwd(p["rrb_0_1"], rrb_0_0)
    rrb_0 = conv_transpose3d_s2(rrb_0_1, p["up_0"])

    rrb_2 = nearest_upsample(rrb_2, 4)   # F.interpolate(scale_factor=4), nearest
    rrb_1 = nearest_upsample(rrb_1, 2)   # F.interpolate(scale_factor=2), nearest
    return rrb_0, rrb_1, rrb_2


# ----------------------------- SegHead -----------------------------

def seghead_init(kg, in_dims):
    return {
        "conv_1a": _conv3d_init(kg(), in_dims, 32, 3), "bn_1a": _bn_init(32),
        "conv_1b": _conv3d_init(kg(), 32, 32, 3), "bn_1b": _bn_init(32),
        "conv_1c": _conv3d_init(kg(), 32, 64, 3),
        "res_2": voxres_init(kg, 64), "res_3": voxres_init(kg, 64),
        "upsample": _convT3d_init(kg(), 64, 64, 2),
        "classifier": _conv3d_init(kg(), 64, 2, 1),
    }


def seghead_fwd(p, x):
    x = conv3d(x, p["conv_1a"], stride=1, padding=1)
    x = batchnorm_act(x, p["bn_1a"], relu=True)
    x = conv3d(x, p["conv_1b"], stride=1, padding=1)
    x = batchnorm_act(x, p["bn_1b"], relu=True)
    x = conv3d(x, p["conv_1c"], stride=2, padding=1)
    x = voxres_fwd(p["res_2"], x)
    x = voxres_fwd(p["res_3"], x)
    x = conv_transpose3d_s2(x, p["upsample"])
    x = conv1x1_small(x, p["classifier"])          # Conv3d(64, 2, 1, 1) — tiny, XLA
    return x


# ----------------------------- NeuralSeg -----------------------------

def neuralseg_init(kg, in_dims):
    return {"featureHead": voxcab_init(kg, in_dims),
            "segHead": seghead_init(kg, 64 * 3)}


def neuralseg_fwd(p, x):
    rrb_0, rrb_1, rrb_2 = voxcab_fwd(p["featureHead"], x)
    rrb = jnp.concatenate([rrb_0, rrb_1, rrb_2], axis=-1)  # torch.cat(dim=1) in NCDHW
    seg_out = seghead_fwd(p["segHead"], rrb)
    return seg_out, rrb


# ----------------------------- main -----------------------------

if __name__ == "__main__":
    key = jax.random.PRNGKey(0)
    pkey, xkey = jax.random.split(key)
    in_dims, N, S = 4, 2, 16

    params = neuralseg_init(KeyGen(pkey), in_dims)

    # PyTorch-convention input: (N, C, D, H, W)
    x_ncdhw = jax.random.normal(xkey, (N, in_dims, S, S, S), jnp.float32)
    x = jnp.transpose(x_ncdhw, (0, 2, 3, 4, 1))            # -> NDHWC for the kernels

    seg_out, rrb = neuralseg_fwd(params, x)

    # Back to PyTorch NCDHW for shape parity with the reference module.
    seg_out = jnp.transpose(seg_out, (0, 4, 1, 2, 3))
    rrb = jnp.transpose(rrb, (0, 4, 1, 2, 3))
    jax.block_until_ready((seg_out, rrb))

    assert seg_out.shape == (N, 2, S, S, S), seg_out.shape
    assert rrb.shape == (N, 192, S, S, S), rrb.shape
    assert bool(jnp.all(jnp.isfinite(seg_out))) and bool(jnp.all(jnp.isfinite(rrb)))
    print("KERNEL_OK")
</pallas_src>

<mosaic_0001>
module attributes {stable_mosaic.version = 11 : i64} {
  func.func @_mm_kernel(%arg0: i32, %arg1: memref<1024x108xbf16, #tpu.memory_space<vmem>>, %arg2: memref<108x128xbf16, #tpu.memory_space<vmem>>, %arg3: memref<1x128xf32, #tpu.memory_space<vmem>>, %arg4: memref<1024x128xf32, #tpu.memory_space<vmem>>) attributes {dimension_semantics = [#tpu.dimension_semantics<parallel>], iteration_bounds = array<i64: 8>, scalar_prefetch = 0 : i64, scratch_operands = 0 : i64, tpu.core_type = #tpu.core_type<tc>, window_params = [{transform_indices = @transform_0, window_bounds = array<i64: 1024, 108>}, {pipeline_mode = #tpu.pipeline_mode<synchronous>, transform_indices = @transform_1, window_bounds = array<i64: 108, 128>}, {pipeline_mode = #tpu.pipeline_mode<synchronous>, transform_indices = @transform_2, window_bounds = array<i64: 1, 128>}, {transform_indices = @transform_3, window_bounds = array<i64: 1024, 128>}]} {
    %c0 = arith.constant 0 : index
    %c0_0 = arith.constant 0 : index
    %0 = vector.load %arg1[%c0, %c0_0] : memref<1024x108xbf16, #tpu.memory_space<vmem>>, vector<1024x108xbf16>
    %c0_1 = arith.constant 0 : index
    %c0_2 = arith.constant 0 : index
    %1 = vector.load %arg2[%c0_1, %c0_2] : memref<108x128xbf16, #tpu.memory_space<vmem>>, vector<108x128xbf16>
    %cst = arith.constant dense<0.000000e+00> : vector<1024x128xf32>
    %2 = tpu.matmul %0, %1, %cst {dimension_numbers = #tpu.dot_dimension_numbers<[1], [0], [0], [1], [0, 0, 1, 1], [], []>} : vector<1024x108xbf16>, vector<108x128xbf16>, vector<1024x128xf32> -> vector<1024x128xf32>
    %c0_3 = arith.constant 0 : index
    %c0_4 = arith.constant 0 : index
    %3 = vector.load %arg3[%c0_3, %c0_4] : memref<1x128xf32, #tpu.memory_space<vmem>>, vector<1x128xf32>
    %4 = vector.broadcast %3 : vector<1x128xf32> to vector<1024x128xf32>
    %5 = arith.addf %2, %4 : vector<1024x128xf32>
    %c0_5 = arith.constant 0 : index
    %c0_6 = arith.constant 0 : index
    %6 = vector.load %arg4[%c0_5, %c0_6] : memref<1024x128xf32, #tpu.memory_space<vmem>>, vector<1024x128xf32>
    tpu.vector_store %arg4[%c0_5, %c0_6], %5 {strides = array<i32>} : memref<1024x128xf32, #tpu.memory_space<vmem>>, vector<1024x128xf32>,
    return
  }
  func.func @transform_0(%arg0: i32) -> (i32, i32) {
    %c0_i32 = arith.constant 0 : i32
    %c0_i32_0 = arith.constant 0 : i32
    return %arg0, %c0_i32 : i32, i32
  }
  func.func @transform_1(%arg0: i32) -> (i32, i32) {
    %c0_i32 = arith.constant 0 : i32
    %c0_i32_0 = arith.constant 0 : i32
    %c0_i32_1 = arith.constant 0 : i32
    return %c0_i32, %c0_i32_0 : i32, i32
  }
  func.func @transform_2(%arg0: i32) -> (i32, i32) {
    %c0_i32 = arith.constant 0 : i32
    %c0_i32_0 = arith.constant 0 : i32
    %c0_i32_1 = arith.constant 0 : i32
    return %c0_i32, %c0_i32_0 : i32, i32
  }
  func.func @transform_3(%arg0: i32) -> (i32, i32) {
    %c0_i32 = arith.constant 0 : i32
    %c0_i32_0 = arith.constant 0 : i32
    return %arg0, %c0_i32 : i32, i32
  }
}

</mosaic_0001>

<llo_original>
// kernel: tpu_custom_call.1
$region0: #{tpu_custom_call.1}
  #allocation0 [shape = 'u32[]', space=smem, size = 0x4, offset = 0x4, fixed_abs, tag = 'smem constant byte address 0x4 - core index']
  #allocation1 [shape = 'u32[72,128]{1,0:T(1,128)}', space=vmem, size = 0x9000, scoped, tag = 'internal scratch']
  %s0 = inlined_call_operand.vmem [shape: bf16[8192,108], index: 0, kind: input, shape index: {}]
  %s1 = inlined_call_operand.vmem [shape: bf16[108,128], index: 1, kind: input, shape index: {}]
  %s2 = inlined_call_operand.vmem [shape: f32[1,128], index: 2, kind: input, shape index: {}]
  %s3 = inlined_call_operand.hbm [shape: f32[8192,128], index: 3, kind: output, shape index: {}]
  %s4 = sld [smem:[#allocation0]]
  $region45: #{tpu_custom_call.1} parent=0
    _
  %s6 = ssub.s32 1, %s4
  %s7 = scalar_select 0, %s6, %s4
  $region1: #{tpu_custom_call.1} parent=0
    #allocation2 [shape = 'u8[1048576]{0}', space=vmem, size = 0x100000, scoped, tag = 'output window, operand 0']
    #allocation3 [shape = 's32[2]{0}', space=sflag, size = 0x8, scoped, tag = 'scoped memory for tpu_custom_call.1']
    %8 = vsyncpa [#allocation3], 0
    %s9 = scalar_lea.sflag [#allocation3], 1
    %10 = vsyncpa %s9, 0
    loop: start=0, step=1, limit=10
    $region2: #{tpu_custom_call.1} parent=1 // loop_pre_header
      _
    $region3: #{tpu_custom_call.1} parent=1 // loop_header
      %s12 = sphi 0, %s16
      %p13 = scmp.ge.s32.totalorder %s12, 10
      %s22 = sphi 0, %s24
      %s25 = sphi 0, %s22
      %s26 = sphi 0, %s25
      %s42 = sphi 0, %s26
      %s46 = sphi 0, %s46
      %s48 = sphi 0, %s46
      %s49 = sphi 0, %s48
      %s63 = sphi 0, %s49
      %s67 = sphi 0, %s67
      %s69 = sphi 0, %s67
      %s70 = sphi 0, %s69
      %s84 = sphi 0, %s70
      %s90 = sphi 0, %s92
      %s93 = sphi 0, %s90
      %s94 = sphi 0, %s93
      %s110 = sphi 0, %s94
    $region4: #{tpu_custom_call.1} parent=1 // loop_header_branch
      %15 = sbr.rel (%p13) target = $region8
    $region5: #{tpu_custom_call.1} parent=1 // loop_body
      %s17 = ssub.s32 %s12, 1
      %s18 = ssub.s32 %s12, 2
      %s19 = sadd.s32 %s12, 1
      %s20 = ssub.s32 %s12, %s19
      %p21 = scmp.eq.s32.totalorder %s20, 0
      %s23 = sadd.s32 %s22, 1
      %s24 = scalar_select %p21, %s22, %s23
      %p27 = pneg %p21
      %p28 = scmp.eq.s32.totalorder %s12, 7
      %p29 = por %p27, %p28
      %p30 = scmp.ne.s32.totalorder %s22, %s25
      %p31 = scmp.eq.s32.totalorder %s12, 0
      %p32 = por %p30, %p31
      %p33 = scmp.ne.s32.totalorder %s22, %s25
      %p34 = scmp.eq.s32.totalorder %s17, 7
      %p35 = por %p33, %p34
      %p36 = scmp.ne.s32.totalorder %s25, %s26
      %p37 = scmp.eq.s32.totalorder %s17, 0
      %p38 = por %p36, %p37
      %p39 = scmp.ne.s32.totalorder %s25, %s26
      %p40 = scmp.eq.s32.totalorder %s18, 7
      %p41 = por %p39, %p40
      %p43 = scmp.ne.s32.totalorder %s26, %s42
      %p44 = scmp.eq.s32.totalorder %s18, 0
      %p45 = por %p43, %p44
      %s47 = sadd.s32 %s46, 1
      %p50 = scmp.eq.s32.totalorder %s12, 7
      %p51 = scmp.ne.s32.totalorder %s46, %s48
      %p52 = scmp.eq.s32.totalorder %s12, 0
      %p53 = por %p51, %p52
      %p54 = scmp.ne.s32.totalorder %s46, %s48
      %p55 = scmp.eq.s32.totalorder %s17, 7
      %p56 = por %p54, %p55
      %p57 = scmp.ne.s32.totalorder %s48, %s49
      %p58 = scmp.eq.s32.totalorder %s17, 0
      %p59 = por %p57, %p58
      %p60 = scmp.ne.s32.totalorder %s48, %s49
      %p61 = scmp.eq.s32.totalorder %s18, 7
      %p62 = por %p60, %p61
      %p64 = scmp.ne.s32.totalorder %s49, %s63
      %p65 = scmp.eq.s32.totalorder %s18, 0
      %p66 = por %p64, %p65
      %s68 = sadd.s32 %s67, 1
      %p71 = scmp.eq.s32.totalorder %s12, 7
      %p72 = scmp.ne.s32.totalorder %s67, %s69
      %p73 = scmp.eq.s32.totalorder %s12, 0
      %p74 = por %p72, %p73
      %p75 = scmp.ne.s32.totalorder %s67, %s69
      %p76 = scmp.eq.s32.totalorder %s17, 7
      %p77 = por %p75, %p76
      %p78 = scmp.ne.s32.totalorder %s69, %s70
      %p79 = scmp.eq.s32.totalorder %s17, 0
      %p80 = por %p78, %p79
      %p81 = scmp.ne.s32.totalorder %s69, %s70
      %p82 = scmp.eq.s32.totalorder %s18, 7
      %p83 = por %p81, %p82
      %p85 = scmp.ne.s32.totalorder %s70, %s84
      %p86 = scmp.eq.s32.totalorder %s18, 0
      %p87 = por %p85, %p86
      %s88 = ssub.s32 %s12, %s19
      %p89 = scmp.eq.s32.totalorder %s88, 0
      %s91 = sadd.s32 %s90, 1
      %s92 = scalar_select %p89, %s90, %s91
      %p95 = pneg %p89
      %p96 = scmp.eq.s32.totalorder %s12, 7
      %p97 = por %p95, %p96
      %p98 = scmp.ne.s32.totalorder %s90, %s93
      %p99 = scmp.eq.s32.totalorder %s12, 0
      %p100 = por %p98, %p99
      %p101 = scmp.ne.s32.totalorder %s90, %s93
      %p102 = scmp.eq.s32.totalorder %s17, 7
      %p103 = por %p101, %p102
      %p104 = scmp.ne.s32.totalorder %s93, %s94
      %p105 = scmp.eq.s32.totalorder %s17, 0
      %p106 = por %p104, %p105
      %p107 = scmp.ne.s32.totalorder %s93, %s94
      %p108 = scmp.eq.s32.totalorder %s18, 7
      %p109 = por %p107, %p108
      %p111 = scmp.ne.s32.totalorder %s94, %s110
      %p112 = scmp.eq.s32.totalorder %s18, 0
      %p113 = por %p111, %p112
      %p114 = scmp.le.s32.totalorder 1, %s12
      %p115 = scmp.lt.s32.totalorder %s12, 9
      %p116 = pnand %p114, %p115
      %p117 = pneg %p116
      // Predicated region
      $region9: #{tpu_custom_call.1} parent=5 // pred_check
        _
      $region10: #{tpu_custom_call.1} parent=5 // pred_check_branch
        %119 = sbr.rel (%p116) target = $region12
      $region11: #{tpu_custom_call.1} parent=5 // pred_region
        %s120 = ssub.s32 %s12, 1
        // Predicated region
        $region13: #{tpu_custom_call.1} parent=11 // pred_check
          %p121 = pneg %p59
        $region14: #{tpu_custom_call.1} parent=11 // pred_check_branch
          %123 = sbr.rel (%p121) target = $region16
        $region15: #{tpu_custom_call.1} parent=11 // pred_region
          _
        $region16: #{tpu_custom_call.1} parent=11 // pred_fallthru
          _
        // Predicated region
        $region17: #{tpu_custom_call.1} parent=11 // pred_check
          %p124 = pneg %p80
        $region18: #{tpu_custom_call.1} parent=11 // pred_check_branch
          %126 = sbr.rel (%p124) target = $region20
        $region19: #{tpu_custom_call.1} parent=11 // pred_region
          _
        $region20: #{tpu_custom_call.1} parent=11 // pred_fallthru
          _
      $region12: #{tpu_custom_call.1} parent=5 // pred_fallthru
        _
      %p127 = scmp.lt.s32.totalorder %s12, 8
      // Predicated region
      $region21: #{tpu_custom_call.1} parent=5 // pred_check
        %p128 = pneg %p127
      $region22: #{tpu_custom_call.1} parent=5 // pred_check_branch
        %130 = sbr.rel (%p128) target = $region24
      $region23: #{tpu_custom_call.1} parent=5 // pred_region
        // Predicated region
        $region25: #{tpu_custom_call.1} parent=23 // pred_check
          %p131 = pneg %p32
        $region26: #{tpu_custom_call.1} parent=23 // pred_check_branch
          %133 = sbr.rel (%p131) target = $region28
        $region27: #{tpu_custom_call.1} parent=23 // pred_region
          %s134 = smul.u32 128, %s12
          %p135 = scmp.lt.s32.totalorder %s134, 1023
          %s136 = scalar_select %p135, %s134, 1023
          %s137 = smul.addr %s136, 4
          %s138 = scalar_lea.vmem %s0, %s137
          %s139 = smul.u32 128, %s12
        $region28: #{tpu_custom_call.1} parent=23 // pred_fallthru
          _
      $region24: #{tpu_custom_call.1} parent=5 // pred_fallthru
        _
      %p140 = scmp.le.s32.totalorder 1, %s12
      %p141 = scmp.lt.s32.totalorder %s12, 9
      %p142 = pnand %p140, %p141
      %p143 = pneg %p142
      // Predicated region
      $region29: #{tpu_custom_call.1} parent=5 // pred_check
        _
      $region30: #{tpu_custom_call.1} parent=5 // pred_check_branch
        %145 = sbr.rel (%p142) target = $region32
      $region31: #{tpu_custom_call.1} parent=5 // pred_region
        %s146 = ssub.s32 %s12, 1
        %s147 = smul.u32 128, %s17
        %p148 = scmp.lt.s32.totalorder %s147, 1023
        %s149 = scalar_select %p148, %s147, 1023
        %s150 = smul.addr %s149, 4
        %s151 = scalar_lea.vmem %s0, %s150
        %p152 = pneg %p38
        %p153 = pneg %p35
        %p154 = pneg %p59
        %p155 = pneg %p56
        %p156 = pneg %p80
        %p157 = pneg %p77
        %p158 = pneg %p106
        %p159 = pneg %p103
        %s160 = sand.u32 %s93, 1
        %s161 = scalar_lea.sflag [#allocation3], %s160
        %s162 = sand.u32 %s93, 1
        %s163 = smul.addr %s162, 1024
        %s164 = scalar_lea.vmem [#allocation2], %s163
        %s165 = smul.u32 128, %s17
        %p166 = scmp.lt.s32.totalorder %s165, 1023
        %s167 = scalar_select %p166, %s165, 1023
        %s168 = smul.addr %s167, 4
        %s169 = scalar_lea.vmem %s0, %s168
        %s170 = smul.u32 128, %s17
        %s171 = smul.u32 128, %s17
        %v173 = vld [vmem:[%s169] sm:$0xf]
        %v174 = vld [vmem:[%s169 + $0x4] sm:$0xf]
        %v175 = vld [vmem:[%s169 + $0x8] sm:$0xf]
        %v176 = vld [vmem:[%s169 + $0xc] sm:$0xf]
        %v177 = vld [vmem:[%s169 + $0x10] sm:$0xf]
        %v178 = vld [vmem:[%s169 + $0x14] sm:$0xf]
        %v179 = vld [vmem:[%s169 + $0x18] sm:$0xf]
        %v180 = vld [vmem:[%s169 + $0x1c] sm:$0xf]
        %v181 = vld [vmem:[%s169 + $0x20] sm:$0xf]
        %v182 = vld [vmem:[%s169 + $0x24] sm:$0xf]
        %v183 = vld [vmem:[%s169 + $0x28] sm:$0xf]
        %v184 = vld [vmem:[%s169 + $0x2c] sm:$0xf]
        %v185 = vld [vmem:[%s169 + $0x30] sm:$0xf]
        %v186 = vld [vmem:[%s169 + $0x34] sm:$0xf]
        %v187 = vld [vmem:[%s169 + $0x38] sm:$0xf]
        %v188 = vld [vmem:[%s169 + $0x3c] sm:$0xf]
        %v189 = vld [vmem:[%s169 + $0x40] sm:$0xf]
        %v190 = vld [vmem:[%s169 + $0x44] sm:$0xf]
        %v191 = vld [vmem:[%s169 + $0x48] sm:$0xf]
        %v192 = vld [vmem:[%s169 + $0x4c] sm:$0xf]
        %v193 = vld [vmem:[%s169 + $0x50] sm:$0xf]
        %v194 = vld [vmem:[%s169 + $0x54] sm:$0xf]
        %v195 = vld [vmem:[%s169 + $0x58] sm:$0xf]
        %v196 = vld [vmem:[%s169 + $0x5c] sm:$0xf]
        %v197 = vld [vmem:[%s169 + $0x60] sm:$0xf]
        %v198 = vld [vmem:[%s169 + $0x64] sm:$0xf]
        %v199 = vld [vmem:[%s169 + $0x68] sm:$0xf]
        %v200 = vld [vmem:[%s169 + $0x6c] sm:$0xf]
        %v201 = vld [vmem:[%s169 + $0x70] sm:$0xf]
        %v202 = vld [vmem:[%s169 + $0x74] sm:$0xf]
        %v203 = vld [vmem:[%s169 + $0x78] sm:$0xf]
        %v204 = vld [vmem:[%s169 + $0x7c] sm:$0xf]
        %v205 = vld [vmem:[%s169 + $0x80] sm:$0xf]
        %v206 = vld [vmem:[%s169 + $0x84] sm:$0xf]
        %v207 = vld [vmem:[%s169 + $0x88] sm:$0xf]
        %v208 = vld [vmem:[%s169 + $0x8c] sm:$0xf]
        %v209 = vld [vmem:[%s169 + $0x90] sm:$0xf]
        %v210 = vld [vmem:[%s169 + $0x94] sm:$0xf]
        %v211 = vld [vmem:[%s169 + $0x98] sm:$0xf]
        %v212 = vld [vmem:[%s169 + $0x9c] sm:$0xf]
        %v213 = vld [vmem:[%s169 + $0xa0] sm:$0xf]
        %v214 = vld [vmem:[%s169 + $0xa4] sm:$0xf]
        %v215 = vld [vmem:[%s169 + $0xa8] sm:$0xf]
        %v216 = vld [vmem:[%s169 + $0xac] sm:$0xf]
        %v217 = vld [vmem:[%s169 + $0xb0] sm:$0xf]
        %v218 = vld [vmem:[%s169 + $0xb4] sm:$0xf]
        %v219 = vld [vmem:[%s169 + $0xb8] sm:$0xf]
        %v220 = vld [vmem:[%s169 + $0xbc] sm:$0xf]
        %v221 = vld [vmem:[%s169 + $0xc0] sm:$0xf]
        %v222 = vld [vmem:[%s169 + $0xc4] sm:$0xf]
        %v223 = vld [vmem:[%s169 + $0xc8] sm:$0xf]
        %v224 = vld [vmem:[%s169 + $0xcc] sm:$0xf]
        %v225 = vld [vmem:[%s169 + $0xd0] sm:$0xf]
        %v226 = vld [vmem:[%s169 + $0xd4] sm:$0xf]
        %v227 = vld [vmem:[%s169 + $0xd8] sm:$0xf]
        %v228 = vld [vmem:[%s169 + $0xdc] sm:$0xf]
        %v229 = vld [vmem:[%s169 + $0xe0] sm:$0xf]
        %v230 = vld [vmem:[%s169 + $0xe4] sm:$0xf]
        %v231 = vld [vmem:[%s169 + $0xe8] sm:$0xf]
        %v232 = vld [vmem:[%s169 + $0xec] sm:$0xf]
        %v233 = vld [vmem:[%s169 + $0xf0] sm:$0xf]
        %v234 = vld [vmem:[%s169 + $0xf4] sm:$0xf]
        %v235 = vld [vmem:[%s169 + $0xf8] sm:$0xf]
        %v236 = vld [vmem:[%s169 + $0xfc] sm:$0xf]
        %v237 = vld [vmem:[%s169 + $0x100] sm:$0xf]
        %v238 = vld [vmem:[%s169 + $0x104] sm:$0xf]
        %v239 = vld [vmem:[%s169 + $0x108] sm:$0xf]
        %v240 = vld [vmem:[%s169 + $0x10c] sm:$0xf]
        %v241 = vld [vmem:[%s169 + $0x110] sm:$0xf]
        %v242 = vld [vmem:[%s169 + $0x114] sm:$0xf]
        %v243 = vld [vmem:[%s169 + $0x118] sm:$0xf]
        %v244 = vld [vmem:[%s169 + $0x11c] sm:$0xf]
        %v245 = vld [vmem:[%s169 + $0x120] sm:$0xf]
        %v246 = vld [vmem:[%s169 + $0x124] sm:$0xf]
        %v247 = vld [vmem:[%s169 + $0x128] sm:$0xf]
        %v248 = vld [vmem:[%s169 + $0x12c] sm:$0xf]
        %v249 = vld [vmem:[%s169 + $0x130] sm:$0xf]
        %v250 = vld [vmem:[%s169 + $0x134] sm:$0xf]
        %v251 = vld [vmem:[%s169 + $0x138] sm:$0xf]
        %v252 = vld [vmem:[%s169 + $0x13c] sm:$0xf]
        %v253 = vld [vmem:[%s169 + $0x140] sm:$0xf]
        %v254 = vld [vmem:[%s169 + $0x144] sm:$0xf]
        %v255 = vld [vmem:[%s169 + $0x148] sm:$0xf]
        %v256 = vld [vmem:[%s169 + $0x14c] sm:$0xf]
        %v257 = vld [vmem:[%s169 + $0x150] sm:$0xf]
        %v258 = vld [vmem:[%s169 + $0x154] sm:$0xf]
        %v259 = vld [vmem:[%s169 + $0x158] sm:$0xf]
        %v260 = vld [vmem:[%s169 + $0x15c] sm:$0xf]
        %v261 = vld [vmem:[%s169 + $0x160] sm:$0xf]
        %v262 = vld [vmem:[%s169 + $0x164] sm:$0xf]
        %v263 = vld [vmem:[%s169 + $0x168] sm:$0xf]
        %v264 = vld [vmem:[%s169 + $0x16c] sm:$0xf]
        %v265 = vld [vmem:[%s169 + $0x170] sm:$0xf]
        %v266 = vld [vmem:[%s169 + $0x174] sm:$0xf]
        %v267 = vld [vmem:[%s169 + $0x178] sm:$0xf]
        %v268 = vld [vmem:[%s169 + $0x17c] sm:$0xf]
        %v269 = vld [vmem:[%s169 + $0x180] sm:$0xf]
        %v270 = vld [vmem:[%s169 + $0x184] sm:$0xf]
        %v271 = vld [vmem:[%s169 + $0x188] sm:$0xf]
        %v272 = vld [vmem:[%s169 + $0x18c] sm:$0xf]
        %v273 = vld [vmem:[%s169 + $0x190] sm:$0xf]
        %v274 = vld [vmem:[%s169 + $0x194] sm:$0xf]
        %v275 = vld [vmem:[%s169 + $0x198] sm:$0xf]
        %v276 = vld [vmem:[%s169 + $0x19c] sm:$0xf]
        %v277 = vld [vmem:[%s169 + $0x1a0] sm:$0xf]
        %v278 = vld [vmem:[%s169 + $0x1a4] sm:$0xf]
        %v279 = vld [vmem:[%s169 + $0x1a8] sm:$0xf]
        %v280 = vld [vmem:[%s169 + $0x1ac] sm:$0xf]
        %v281 = vld [vmem:[%s169 + $0x1b0] sm:$0xf]
        %v282 = vld [vmem:[%s169 + $0x1b4] sm:$0xf]
        %v283 = vld [vmem:[%s169 + $0x1b8] sm:$0xf]
        %v284 = vld [vmem:[%s169 + $0x1bc] sm:$0xf]
        %v285 = vld [vmem:[%s169 + $0x1c0] sm:$0xf]
        %v286 = vld [vmem:[%s169 + $0x1c4] sm:$0xf]
        %v287 = vld [vmem:[%s169 + $0x1c8] sm:$0xf]
        %v288 = vld [vmem:[%s169 + $0x1cc] sm:$0xf]
        %v289 = vld [vmem:[%s169 + $0x1d0] sm:$0xf]
        %v290 = vld [vmem:[%s169 + $0x1d4] sm:$0xf]
        %v291 = vld [vmem:[%s169 + $0x1d8] sm:$0xf]
        %v292 = vld [vmem:[%s169 + $0x1dc] sm:$0xf]
        %v293 = vld [vmem:[%s169 + $0x1e0] sm:$0xf]
        %v294 = vld [vmem:[%s169 + $0x1e4] sm:$0xf]
        %v295 = vld [vmem:[%s169 + $0x1e8] sm:$0xf]
        %v296 = vld [vmem:[%s169 + $0x1ec] sm:$0xf]
        %v297 = vld [vmem:[%s169 + $0x1f0] sm:$0xf]
        %v298 = vld [vmem:[%s169 + $0x1f4] sm:$0xf]
        %v299 = vld [vmem:[%s169 + $0x1f8] sm:$0xf]
        %v300 = vld [vmem:[%s169 + $0x1fc] sm:$0xf]
        %v301 = vld [vmem:[%s1] sm:$0xf]
        %v302 = vld [vmem:[%s1 + $0x4] sm:$0xf]
        %v303 = vld [vmem:[%s1 + $0x8] sm:$0xf]
        %v304 = vld [vmem:[%s1 + $0xc] sm:$0xf]
        %v305 = vld [vmem:[%s1 + $0x10] sm:$0xf]
        %v306 = vld [vmem:[%s1 + $0x14] sm:$0xf]
        %v307 = vld [vmem:[%s1 + $0x18] sm:$0xf]
        %v308 = vld [vmem:[%s1 + $0x1c] sm:$0xf]
        %v309 = vld [vmem:[%s1 + $0x20] sm:$0xf]
        %v310 = vld [vmem:[%s1 + $0x24] sm:$0xf]
        %v311 = vld [vmem:[%s1 + $0x28] sm:$0xf]
        %v312 = vld [vmem:[%s1 + $0x2c] sm:$0xf]
        %v313 = vld [vmem:[%s1 + $0x30] sm:$0xf]
        %v314 = vld [vmem:[%s1 + $0x34] sm:$0x3]
        %v315 = vld [vmem:[%s2] sm:$0x1]
        %v317 = vperm.slane %v315, 0
        %v447 = vunpack.c.l.b16 %v173
        %v448 = vunpack.c.l.b16 %v174
        %v449 = vunpack.c.l.b16 %v175
        %v450 = vunpack.c.l.b16 %v176
        %v451 = vunpack.c.l.b16 %v177
        %v452 = vunpack.c.l.b16 %v178
        %v453 = vunpack.c.l.b16 %v179
        %v454 = vunpack.c.l.b16 %v180
        %v455 = vunpack.c.l.b16 %v181
        %v456 = vunpack.c.l.b16 %v182
        %v457 = vunpack.c.l.b16 %v183
        %v458 = vunpack.c.l.b16 %v184
        %v459 = vunpack.c.l.b16 %v185
        %v460 = vunpack.c.l.b16 %v186
        %v461 = vunpack.c.l.b16 %v187
        %v462 = vunpack.c.l.b16 %v188
        %v463 = vunpack.c.l.b16 %v189
        %v464 = vunpack.c.l.b16 %v190
        %v465 = vunpack.c.l.b16 %v191
        %v466 = vunpack.c.l.b16 %v192
        %v467 = vunpack.c.l.b16 %v193
        %v468 = vunpack.c.l.b16 %v194
        %v469 = vunpack.c.l.b16 %v195
        %v470 = vunpack.c.l.b16 %v196
        %v471 = vunpack.c.l.b16 %v197
        %v472 = vunpack.c.l.b16 %v198
        %v473 = vunpack.c.l.b16 %v199
        %v474 = vunpack.c.l.b16 %v200
        %v475 = vunpack.c.l.b16 %v201
        %v476 = vunpack.c.l.b16 %v202
        %v477 = vunpack.c.l.b16 %v203
        %v478 = vunpack.c.l.b16 %v204
        %v479 = vunpack.c.l.b16 %v205
        %v480 = vunpack.c.l.b16 %v206
        %v481 = vunpack.c.l.b16 %v207
        %v482 = vunpack.c.l.b16 %v208
        %v483 = vunpack.c.l.b16 %v209
        %v484 = vunpack.c.l.b16 %v210
        %v485 = vunpack.c.l.b16 %v211
        %v486 = vunpack.c.l.b16 %v212
        %v487 = vunpack.c.l.b16 %v213
        %v488 = vunpack.c.l.b16 %v214
        %v489 = vunpack.c.l.b16 %v215
        %v490 = vunpack.c.l.b16 %v216
        %v491 = vunpack.c.l.b16 %v217
        %v492 = vunpack.c.l.b16 %v218
        %v493 = vunpack.c.l.b16 %v219
        %v494 = vunpack.c.l.b16 %v220
        %v495 = vunpack.c.l.b16 %v221
        %v496 = vunpack.c.l.b16 %v222
        %v497 = vunpack.c.l.b16 %v223
        %v498 = vunpack.c.l.b16 %v224
        %v499 = vunpack.c.l.b16 %v225
        %v500 = vunpack.c.l.b16 %v226
        %v501 = vunpack.c.l.b16 %v227
        %v502 = vunpack.c.l.b16 %v228
        %v503 = vunpack.c.l.b16 %v229
        %v504 = vunpack.c.l.b16 %v230
        %v505 = vunpack.c.l.b16 %v231
        %v506 = vunpack.c.l.b16 %v232
        %v507 = vunpack.c.l.b16 %v233
        %v508 = vunpack.c.l.b16 %v234
        %v509 = vunpack.c.l.b16 %v235
        %v510 = vunpack.c.l.b16 %v236
        %v511 = vunpack.c.l.b16 %v237
        %v512 = vunpack.c.l.b16 %v238
        %v513 = vunpack.c.l.b16 %v239
        %v514 = vunpack.c.l.b16 %v240
        %v515 = vunpack.c.l.b16 %v241
        %v516 = vunpack.c.l.b16 %v242
        %v517 = vunpack.c.l.b16 %v243
        %v518 = vunpack.c.l.b16 %v244
        %v519 = vunpack.c.l.b16 %v245
        %v520 = vunpack.c.l.b16 %v246
        %v521 = vunpack.c.l.b16 %v247
        %v522 = vunpack.c.l.b16 %v248
        %v523 = vunpack.c.l.b16 %v249
        %v524 = vunpack.c.l.b16 %v250
        %v525 = vunpack.c.l.b16 %v251
        %v526 = vunpack.c.l.b16 %v252
        %v527 = vunpack.c.l.b16 %v253
        %v528 = vunpack.c.l.b16 %v254
        %v529 = vunpack.c.l.b16 %v255
        %v530 = vunpack.c.l.b16 %v256
        %v531 = vunpack.c.l.b16 %v257
        %v532 = vunpack.c.l.b16 %v258
        %v533 = vunpack.c.l.b16 %v259
        %v534 = vunpack.c.l.b16 %v260
        %v535 = vunpack.c.l.b16 %v261
        %v536 = vunpack.c.l.b16 %v262
        %v537 = vunpack.c.l.b16 %v263
        %v538 = vunpack.c.l.b16 %v264
        %v539 = vunpack.c.l.b16 %v265
        %v540 = vunpack.c.l.b16 %v266
        %v541 = vunpack.c.l.b16 %v267
        %v542 = vunpack.c.l.b16 %v268
        %v543 = vunpack.c.l.b16 %v269
        %v544 = vunpack.c.l.b16 %v270
        %v545 = vunpack.c.l.b16 %v271
        %v546 = vunpack.c.l.b16 %v272
        %v547 = vunpack.c.l.b16 %v273
        %v548 = vunpack.c.l.b16 %v274
        %v549 = vunpack.c.l.b16 %v275
        %v550 = vunpack.c.l.b16 %v276
        %v551 = vunpack.c.l.b16 %v277
        %v552 = vunpack.c.l.b16 %v278
        %v553 = vunpack.c.l.b16 %v279
        %v554 = vunpack.c.l.b16 %v280
        %v555 = vunpack.c.l.b16 %v281
        %v556 = vunpack.c.l.b16 %v282
        %v557 = vunpack.c.l.b16 %v283
        %v558 = vunpack.c.l.b16 %v284
        %v559 = vunpack.c.l.b16 %v285
        %v560 = vunpack.c.l.b16 %v286
        %v561 = vunpack.c.l.b16 %v287
        %v562 = vunpack.c.l.b16 %v288
        %v563 = vunpack.c.l.b16 %v289
        %v564 = vunpack.c.l.b16 %v290
        %v565 = vunpack.c.l.b16 %v291
        %v566 = vunpack.c.l.b16 %v292
        %v567 = vunpack.c.l.b16 %v293
        %v568 = vunpack.c.l.b16 %v294
        %v569 = vunpack.c.l.b16 %v295
        %v570 = vunpack.c.l.b16 %v296
        %v571 = vunpack.c.l.b16 %v297
        %v572 = vunpack.c.l.b16 %v298
        %v573 = vunpack.c.l.b16 %v299
        %v574 = vunpack.c.l.b16 %v300
        %v575 = vpack.c.b16 %v448, %v447
        %v576 = vpack.c.b16 %v450, %v449
        %v577 = vpack.c.b16 %v452, %v451
        %v578 = vpack.c.b16 %v454, %v453
        %v579 = vpack.c.b16 %v456, %v455
        %v580 = vpack.c.b16 %v458, %v457
        %v581 = vpack.c.b16 %v460, %v459
        %v582 = vpack.c.b16 %v462, %v461
        %v583 = vpack.c.b16 %v464, %v463
        %v584 = vpack.c.b16 %v466, %v465
        %v585 = vpack.c.b16 %v468, %v467
        %v586 = vpack.c.b16 %v470, %v469
        %v587 = vpack.c.b16 %v472, %v471
        %v588 = vpack.c.b16 %v474, %v473
        %v589 = vpack.c.b16 %v476, %v475
        %v590 = vpack.c.b16 %v478, %v477
        %v591 = vpack.c.b16 %v480, %v479
        %v592 = vpack.c.b16 %v482, %v481
        %v593 = vpack.c.b16 %v484, %v483
        %v594 = vpack.c.b16 %v486, %v485
        %v595 = vpack.c.b16 %v488, %v487
        %v596 = vpack.c.b16 %v490, %v489
        %v597 = vpack.c.b16 %v492, %v491
        %v598 = vpack.c.b16 %v494, %v493
        %v599 = vpack.c.b16 %v496, %v495
        %v600 = vpack.c.b16 %v498, %v497
        %v601 = vpack.c.b16 %v500, %v499
        %v602 = vpack.c.b16 %v502, %v501
        %v603 = vpack.c.b16 %v504, %v503
        %v604 = vpack.c.b16 %v506, %v505
        %v605 = vpack.c.b16 %v508, %v507
        %v606 = vpack.c.b16 %v510, %v509
        %v607 = vpack.c.b16 %v512, %v511
        %v608 = vpack.c.b16 %v514, %v513
        %v609 = vpack.c.b16 %v516, %v515
        %v610 = vpack.c.b16 %v518, %v517
        %v611 = vpack.c.b16 %v520, %v519
        %v612 = vpack.c.b16 %v522, %v521
        %v613 = vpack.c.b16 %v524, %v523
        %v614 = vpack.c.b16 %v526, %v525
        %v615 = vpack.c.b16 %v528, %v527
        %v616 = vpack.c.b16 %v530, %v529
        %v617 = vpack.c.b16 %v532, %v531
        %v618 = vpack.c.b16 %v534, %v533
        %v619 = vpack.c.b16 %v536, %v535
        %v620 = vpack.c.b16 %v538, %v537
        %v621 = vpack.c.b16 %v540, %v539
        %v622 = vpack.c.b16 %v542, %v541
        %v623 = vpack.c.b16 %v544, %v543
        %v624 = vpack.c.b16 %v546, %v545
        %v625 = vpack.c.b16 %v548, %v547
        %v626 = vpack.c.b16 %v550, %v549
        %v627 = vpack.c.b16 %v552, %v551
        %v628 = vpack.c.b16 %v554, %v553
        %v629 = vpack.c.b16 %v556, %v555
        %v630 = vpack.c.b16 %v558, %v557
        %v631 = vpack.c.b16 %v560, %v559
        %v632 = vpack.c.b16 %v562, %v561
        %v633 = vpack.c.b16 %v564, %v563
        %v634 = vpack.c.b16 %v566, %v565
        %v635 = vpack.c.b16 %v568, %v567
        %v636 = vpack.c.b16 %v570, %v569
        %v637 = vpack.c.b16 %v572, %v571
        %v638 = vpack.c.b16 %v574, %v573
        %v653 = vunpack.c.l.b16 %v301
        %v654 = vunpack.c.l.b16 %v302
        %v655 = vunpack.c.l.b16 %v303
        %v656 = vunpack.c.l.b16 %v304
        %v657 = vunpack.c.l.b16 %v305
        %v658 = vunpack.c.l.b16 %v306
        %v659 = vunpack.c.l.b16 %v307
        %v660 = vunpack.c.l.b16 %v308
        %v661 = vunpack.c.l.b16 %v309
        %v662 = vunpack.c.l.b16 %v310
        %v663 = vunpack.c.l.b16 %v311
        %v664 = vunpack.c.l.b16 %v312
        %v665 = vunpack.c.l.b16 %v313
        %v666 = vunpack.c.l.b16 %v314
        %v667 = vpack.c.b16 %v654, %v653
        %v668 = vpack.c.b16 %v656, %v655
        %v669 = vpack.c.b16 %v658, %v657
        %v670 = vpack.c.b16 %v660, %v659
        %v671 = vpack.c.b16 %v662, %v661
        %v672 = vpack.c.b16 %v664, %v663
        %v673 = vpack.c.b16 %v666, %v665
        %vm680 = vcmask 883712
        %v682 = vsel %vm680, %v575, 0
        %v685 = vsel %vm680, %v576, 0
        %v688 = vsel %vm680, %v577, 0
        %v691 = vsel %vm680, %v578, 0
        %v694 = vsel %vm680, %v579, 0
        %v697 = vsel %vm680, %v580, 0
        %v700 = vsel %vm680, %v581, 0
        %v703 = vsel %vm680, %v582, 0
        %v706 = vsel %vm680, %v583, 0
        %v709 = vsel %vm680, %v584, 0
        %v712 = vsel %vm680, %v585, 0
        %v715 = vsel %vm680, %v586, 0
        %v718 = vsel %vm680, %v587, 0
        %v721 = vsel %vm680, %v588, 0
        %v724 = vsel %vm680, %v589, 0
        %v727 = vsel %vm680, %v590, 0
        %v730 = vsel %vm680, %v591, 0
        %v733 = vsel %vm680, %v592, 0
        %v736 = vsel %vm680, %v593, 0
        %v739 = vsel %vm680, %v594, 0
        %v742 = vsel %vm680, %v595, 0
        %v745 = vsel %vm680, %v596, 0
        %v748 = vsel %vm680, %v597, 0
        %v751 = vsel %vm680, %v598, 0
        %v754 = vsel %vm680, %v599, 0
        %v757 = vsel %vm680, %v600, 0
        %v760 = vsel %vm680, %v601, 0
        %v763 = vsel %vm680, %v602, 0
        %v766 = vsel %vm680, %v603, 0
        %v769 = vsel %vm680, %v604, 0
        %v772 = vsel %vm680, %v605, 0
        %v775 = vsel %vm680, %v606, 0
        %v778 = vsel %vm680, %v607, 0
        %v781 = vsel %vm680, %v608, 0
        %v784 = vsel %vm680, %v609, 0
        %v787 = vsel %vm680, %v610, 0
        %v790 = vsel %vm680, %v611, 0
        %v793 = vsel %vm680, %v612, 0
        %v796 = vsel %vm680, %v613, 0
        %v799 = vsel %vm680, %v614, 0
        %v802 = vsel %vm680, %v615, 0
        %v805 = vsel %vm680, %v616, 0
        %v808 = vsel %vm680, %v617, 0
        %v811 = vsel %vm680, %v618, 0
        %v814 = vsel %vm680, %v619, 0
        %v817 = vsel %vm680, %v620, 0
        %v820 = vsel %vm680, %v621, 0
        %v823 = vsel %vm680, %v622, 0
        %v826 = vsel %vm680, %v623, 0
        %v829 = vsel %vm680, %v624, 0
        %v832 = vsel %vm680, %v625, 0
        %v835 = vsel %vm680, %v626, 0
        %v838 = vsel %vm680, %v627, 0
        %v841 = vsel %vm680, %v628, 0
        %v844 = vsel %vm680, %v629, 0
        %v847 = vsel %vm680, %v630, 0
        %v850 = vsel %vm680, %v631, 0
        %v853 = vsel %vm680, %v632, 0
        %v856 = vsel %vm680, %v633, 0
        %v859 = vsel %vm680, %v634, 0
        %v862 = vsel %vm680, %v635, 0
        %v865 = vsel %vm680, %v636, 0
        %v868 = vsel %vm680, %v637, 0
        %v871 = vsel %vm680, %v638, 0
        %vm873 = vcmask 1045504
        %v875 = vsel %vm873, %v673, 0
        %877 = vmatpush.bf16.msra.mxu0 0
        %878 = vmatpush.bf16.msra.mxu0 %v875
        %879 = vmatpush.bf16.msra.mxu0 %v672
        %880 = vmatpush.bf16.msra.mxu0 %v671
        %881 = vmatpush.bf16.msra.mxu0 %v670
        %882 = vmatpush.bf16.msra.mxu0 %v669
        %883 = vmatpush.bf16.msra.mxu0 %v668
        %884 = vmatpush.bf16.msra.mxu0 %v667
        %885 = vmatmul.bf16.gmra.mxu0 %v682
        %v886 = vpop.f32.mrf.mxu0
        %v887 = vadd.f32 %v317, %v886
        %v888 = vpop.f32.mrf.mxu0
        %v889 = vadd.f32 %v317, %v888
        %890 = vmatmul.bf16.gmra.mxu0 %v685
        %v891 = vpop.f32.mrf.mxu0
        %v892 = vadd.f32 %v317, %v891
        %v893 = vpop.f32.mrf.mxu0
        %v894 = vadd.f32 %v317, %v893
        %895 = vmatmul.bf16.gmra.mxu0 %v688
        %v896 = vpop.f32.mrf.mxu0
        %v897 = vadd.f32 %v317, %v896
        %v898 = vpop.f32.mrf.mxu0
        %v899 = vadd.f32 %v317, %v898
        %900 = vmatmul.bf16.gmra.mxu0 %v691
        %v901 = vpop.f32.mrf.mxu0
        %v902 = vadd.f32 %v317, %v901
        %v903 = vpop.f32.mrf.mxu0
        %v904 = vadd.f32 %v317, %v903
        %905 = vmatmul.bf16.gmra.mxu0 %v694
        %v906 = vpop.f32.mrf.mxu0
        %v907 = vadd.f32 %v317, %v906
        %v908 = vpop.f32.mrf.mxu0
        %v909 = vadd.f32 %v317, %v908
        %910 = vmatmul.bf16.gmra.mxu0 %v697
        %v911 = vpop.f32.mrf.mxu0
        %v912 = vadd.f32 %v317, %v911
        %v913 = vpop.f32.mrf.mxu0
        %v914 = vadd.f32 %v317, %v913
        %915 = vmatmul.bf16.gmra.mxu0 %v700
        %v916 = vpop.f32.mrf.mxu0
        %v917 = vadd.f32 %v317, %v916
        %v918 = vpop.f32.mrf.mxu0
        %v919 = vadd.f32 %v317, %v918
        %920 = vmatmul.bf16.gmra.mxu0 %v703
        %v921 = vpop.f32.mrf.mxu0
        %v922 = vadd.f32 %v317, %v921
        %v923 = vpop.f32.mrf.mxu0
        %v924 = vadd.f32 %v317, %v923
        %925 = vmatmul.bf16.gmra.mxu0 %v706
        %v926 = vpop.f32.mrf.mxu0
        %v927 = vadd.f32 %v317, %v926
        %v928 = vpop.f32.mrf.mxu0
        %v929 = vadd.f32 %v317, %v928
        %930 = vmatmul.bf16.gmra.mxu0 %v709
        %v931 = vpop.f32.mrf.mxu0
        %v932 = vadd.f32 %v317, %v931
        %v933 = vpop.f32.mrf.mxu0
        %v934 = vadd.f32 %v317, %v933
        %935 = vmatmul.bf16.gmra.mxu0 %v712
        %v936 = vpop.f32.mrf.mxu0
        %v937 = vadd.f32 %v317, %v936
        %v938 = vpop.f32.mrf.mxu0
        %v939 = vadd.f32 %v317, %v938
        %940 = vmatmul.bf16.gmra.mxu0 %v715
        %v941 = vpop.f32.mrf.mxu0
        %v942 = vadd.f32 %v317, %v941
        %v943 = vpop.f32.mrf.mxu0
        %v944 = vadd.f32 %v317, %v943
        %945 = vmatmul.bf16.gmra.mxu0 %v718
        %v946 = vpop.f32.mrf.mxu0
        %v947 = vadd.f32 %v317, %v946
        %v948 = vpop.f32.mrf.mxu0
        %v949 = vadd.f32 %v317, %v948
        %950 = vmatmul.bf16.gmra.mxu0 %v721
        %v951 = vpop.f32.mrf.mxu0
        %v952 = vadd.f32 %v317, %v951
        %v953 = vpop.f32.mrf.mxu0
        %v954 = vadd.f32 %v317, %v953
        %955 = vmatmul.bf16.gmra.mxu0 %v724
        %v956 = vpop.f32.mrf.mxu0
        %v957 = vadd.f32 %v317, %v956
        %v958 = vpop.f32.mrf.mxu0
        %v959 = vadd.f32 %v317, %v958
        %960 = vmatmul.bf16.gmra.mxu0 %v727
        %v961 = vpop.f32.mrf.mxu0
        %v962 = vadd.f32 %v317, %v961
        %v963 = vpop.f32.mrf.mxu0
        %v964 = vadd.f32 %v317, %v963
        %965 = vmatmul.bf16.gmra.mxu0 %v730
        %v966 = vpop.f32.mrf.mxu0
        %v967 = vadd.f32 %v317, %v966
        %v968 = vpop.f32.mrf.mxu0
        %v969 = vadd.f32 %v317, %v968
        %970 = vmatmul.bf16.gmra.mxu0 %v733
        %v971 = vpop.f32.mrf.mxu0
        %v972 = vadd.f32 %v317, %v971
        %v973 = vpop.f32.mrf.mxu0
        %v974 = vadd.f32 %v317, %v973
        %975 = vmatmul.bf16.gmra.mxu0 %v736
        %v976 = vpop.f32.mrf.mxu0
        %v977 = vadd.f32 %v317, %v976
        %v978 = vpop.f32.mrf.mxu0
        %v979 = vadd.f32 %v317, %v978
        %980 = vmatmul.bf16.gmra.mxu0 %v739
        %v981 = vpop.f32.mrf.mxu0
        %v982 = vadd.f32 %v317, %v981
        %v983 = vpop.f32.mrf.mxu0
        %v984 = vadd.f32 %v317, %v983
        %985 = vmatmul.bf16.gmra.mxu0 %v742
        %v986 = vpop.f32.mrf.mxu0
        %v987 = vadd.f32 %v317, %v986
        %v988 = vpop.f32.mrf.mxu0
        %v989 = vadd.f32 %v317, %v988
        %990 = vmatmul.bf16.gmra.mxu0 %v745
        %v991 = vpop.f32.mrf.mxu0
        %v992 = vadd.f32 %v317, %v991
        %v993 = vpop.f32.mrf.mxu0
        %v994 = vadd.f32 %v317, %v993
        %995 = vmatmul.bf16.gmra.mxu0 %v748
        %v996 = vpop.f32.mrf.mxu0
        %v997 = vadd.f32 %v317, %v996
        %v998 = vpop.f32.mrf.mxu0
        %v999 = vadd.f32 %v317, %v998
        %1000 = vmatmul.bf16.gmra.mxu0 %v751
        %v1001 = vpop.f32.mrf.mxu0
        %v1002 = vadd.f32 %v317, %v1001
        %v1003 = vpop.f32.mrf.mxu0
        %v1004 = vadd.f32 %v317, %v1003
        %1005 = vmatmul.bf16.gmra.mxu0 %v754
        %v1006 = vpop.f32.mrf.mxu0
        %v1007 = vadd.f32 %v317, %v1006
        %v1008 = vpop.f32.mrf.mxu0
        %v1009 = vadd.f32 %v317, %v1008
        %1010 = vmatmul.bf16.gmra.mxu0 %v757
        %v1011 = vpop.f32.mrf.mxu0
        %v1012 = vadd.f32 %v317, %v1011
        %v1013 = vpop.f32.mrf.mxu0
        %v1014 = vadd.f32 %v317, %v1013
        %1015 = vmatmul.bf16.gmra.mxu0 %v760
        %v1016 = vpop.f32.mrf.mxu0
        %v1017 = vadd.f32 %v317, %v1016
        %v1018 = vpop.f32.mrf.mxu0
        %v1019 = vadd.f32 %v317, %v1018
        %1020 = vmatmul.bf16.gmra.mxu0 %v763
        %v1021 = vpop.f32.mrf.mxu0
        %v1022 = vadd.f32 %v317, %v1021
        %v1023 = vpop.f32.mrf.mxu0
        %v1024 = vadd.f32 %v317, %v1023
        %1025 = vmatmul.bf16.gmra.mxu0 %v766
        %v1026 = vpop.f32.mrf.mxu0
        %v1027 = vadd.f32 %v317, %v1026
        %v1028 = vpop.f32.mrf.mxu0
        %v1029 = vadd.f32 %v317, %v1028
        %1030 = vmatmul.bf16.gmra.mxu0 %v769
        %v1031 = vpop.f32.mrf.mxu0
        %v1032 = vadd.f32 %v317, %v1031
        %v1033 = vpop.f32.mrf.mxu0
        %v1034 = vadd.f32 %v317, %v1033
        %1035 = vmatmul.bf16.gmra.mxu0 %v772
        %v1036 = vpop.f32.mrf.mxu0
        %v1037 = vadd.f32 %v317, %v1036
        %v1038 = vpop.f32.mrf.mxu0
        %v1039 = vadd.f32 %v317, %v1038
        %1040 = vmatmul.bf16.gmra.mxu0 %v775
        %v1041 = vpop.f32.mrf.mxu0
        %v1042 = vadd.f32 %v317, %v1041
        %v1043 = vpop.f32.mrf.mxu0
        %v1044 = vadd.f32 %v317, %v1043
        %1045 = vmatmul.bf16.gmra.mxu0 %v778
        %v1046 = vpop.f32.mrf.mxu0
        %v1047 = vadd.f32 %v317, %v1046
        %v1048 = vpop.f32.mrf.mxu0
        %v1049 = vadd.f32 %v317, %v1048
        %1050 = vmatmul.bf16.gmra.mxu0 %v781
        %v1051 = vpop.f32.mrf.mxu0
        %v1052 = vadd.f32 %v317, %v1051
        %v1053 = vpop.f32.mrf.mxu0
        %v1054 = vadd.f32 %v317, %v1053
        %1055 = vmatmul.bf16.gmra.mxu0 %v784
        %v1056 = vpop.f32.mrf.mxu0
        %v1057 = vadd.f32 %v317, %v1056
        %v1058 = vpop.f32.mrf.mxu0
        %v1059 = vadd.f32 %v317, %v1058
        %1060 = vmatmul.bf16.gmra.mxu0 %v787
        %v1061 = vpop.f32.mrf.mxu0
        %v1062 = vadd.f32 %v317, %v1061
        %v1063 = vpop.f32.mrf.mxu0
        %v1064 = vadd.f32 %v317, %v1063
        %1065 = vmatmul.bf16.gmra.mxu0 %v790
        %v1066 = vpop.f32.mrf.mxu0
        %v1067 = vadd.f32 %v317, %v1066
        %v1068 = vpop.f32.mrf.mxu0
        %v1069 = vadd.f32 %v317, %v1068
        %1070 = vmatmul.bf16.gmra.mxu0 %v793
        %v1071 = vpop.f32.mrf.mxu0
        %v1072 = vadd.f32 %v317, %v1071
        %v1073 = vpop.f32.mrf.mxu0
        %v1074 = vadd.f32 %v317, %v1073
        %1075 = vmatmul.bf16.gmra.mxu0 %v796
        %v1076 = vpop.f32.mrf.mxu0
        %v1077 = vadd.f32 %v317, %v1076
        %v1078 = vpop.f32.mrf.mxu0
        %v1079 = vadd.f32 %v317, %v1078
        %1080 = vmatmul.bf16.gmra.mxu0 %v799
        %v1081 = vpop.f32.mrf.mxu0
        %v1082 = vadd.f32 %v317, %v1081
        %v1083 = vpop.f32.mrf.mxu0
        %v1084 = vadd.f32 %v317, %v1083
        %1085 = vmatmul.bf16.gmra.mxu0 %v802
        %v1086 = vpop.f32.mrf.mxu0
        %v1087 = vadd.f32 %v317, %v1086
        %v1088 = vpop.f32.mrf.mxu0
        %v1089 = vadd.f32 %v317, %v1088
        %1090 = vmatmul.bf16.gmra.mxu0 %v805
        %v1091 = vpop.f32.mrf.mxu0
        %v1092 = vadd.f32 %v317, %v1091
        %v1093 = vpop.f32.mrf.mxu0
        %v1094 = vadd.f32 %v317, %v1093
        %1095 = vmatmul.bf16.gmra.mxu0 %v808
        %v1096 = vpop.f32.mrf.mxu0
        %v1097 = vadd.f32 %v317, %v1096
        %v1098 = vpop.f32.mrf.mxu0
        %v1099 = vadd.f32 %v317, %v1098
        %1100 = vmatmul.bf16.gmra.mxu0 %v811
        %v1101 = vpop.f32.mrf.mxu0
        %v1102 = vadd.f32 %v317, %v1101
        %v1103 = vpop.f32.mrf.mxu0
        %v1104 = vadd.f32 %v317, %v1103
        %1105 = vmatmul.bf16.gmra.mxu0 %v814
        %v1106 = vpop.f32.mrf.mxu0
        %v1107 = vadd.f32 %v317, %v1106
        %v1108 = vpop.f32.mrf.mxu0
        %v1109 = vadd.f32 %v317, %v1108
        %1110 = vmatmul.bf16.gmra.mxu0 %v817
        %v1111 = vpop.f32.mrf.mxu0
        %v1112 = vadd.f32 %v317, %v1111
        %v1113 = vpop.f32.mrf.mxu0
        %v1114 = vadd.f32 %v317, %v1113
        %1115 = vmatmul.bf16.gmra.mxu0 %v820
        %v1116 = vpop.f32.mrf.mxu0
        %v1117 = vadd.f32 %v317, %v1116
        %v1118 = vpop.f32.mrf.mxu0
        %v1119 = vadd.f32 %v317, %v1118
        %1120 = vmatmul.bf16.gmra.mxu0 %v823
        %v1121 = vpop.f32.mrf.mxu0
        %v1122 = vadd.f32 %v317, %v1121
        %v1123 = vpop.f32.mrf.mxu0
        %v1124 = vadd.f32 %v317, %v1123
        %1125 = vmatmul.bf16.gmra.mxu0 %v826
        %v1126 = vpop.f32.mrf.mxu0
        %v1127 = vadd.f32 %v317, %v1126
        %v1128 = vpop.f32.mrf.mxu0
        %v1129 = vadd.f32 %v317, %v1128
        %1130 = vmatmul.bf16.gmra.mxu0 %v829
        %v1131 = vpop.f32.mrf.mxu0
        %v1132 = vadd.f32 %v317, %v1131
        %v1133 = vpop.f32.mrf.mxu0
        %v1134 = vadd.f32 %v317, %v1133
        %1135 = vmatmul.bf16.gmra.mxu0 %v832
        %v1136 = vpop.f32.mrf.mxu0
        %v1137 = vadd.f32 %v317, %v1136
        %v1138 = vpop.f32.mrf.mxu0
        %v1139 = vadd.f32 %v317, %v1138
        %1140 = vmatmul.bf16.gmra.mxu0 %v835
        %v1141 = vpop.f32.mrf.mxu0
        %v1142 = vadd.f32 %v317, %v1141
        %v1143 = vpop.f32.mrf.mxu0
        %v1144 = vadd.f32 %v317, %v1143
        %1145 = vmatmul.bf16.gmra.mxu0 %v838
        %v1146 = vpop.f32.mrf.mxu0
        %v1147 = vadd.f32 %v317, %v1146
        %v1148 = vpop.f32.mrf.mxu0
        %v1149 = vadd.f32 %v317, %v1148
        %1150 = vmatmul.bf16.gmra.mxu0 %v841
        %v1151 = vpop.f32.mrf.mxu0
        %v1152 = vadd.f32 %v317, %v1151
        %v1153 = vpop.f32.mrf.mxu0
        %v1154 = vadd.f32 %v317, %v1153
        %1155 = vmatmul.bf16.gmra.mxu0 %v844
        %v1156 = vpop.f32.mrf.mxu0
        %v1157 = vadd.f32 %v317, %v1156
        %v1158 = vpop.f32.mrf.mxu0
        %v1159 = vadd.f32 %v317, %v1158
        %1160 = vmatmul.bf16.gmra.mxu0 %v847
        %v1161 = vpop.f32.mrf.mxu0
        %v1162 = vadd.f32 %v317, %v1161
        %v1163 = vpop.f32.mrf.mxu0
        %v1164 = vadd.f32 %v317, %v1163
        %1165 = vmatmul.bf16.gmra.mxu0 %v850
        %v1166 = vpop.f32.mrf.mxu0
        %v1167 = vadd.f32 %v317, %v1166
        %v1168 = vpop.f32.mrf.mxu0
        %v1169 = vadd.f32 %v317, %v1168
        %1170 = vmatmul.bf16.gmra.mxu0 %v853
        %v1171 = vpop.f32.mrf.mxu0
        %v1172 = vadd.f32 %v317, %v1171
        %v1173 = vpop.f32.mrf.mxu0
        %v1174 = vadd.f32 %v317, %v1173
        %1175 = vmatmul.bf16.gmra.mxu0 %v856
        %v1176 = vpop.f32.mrf.mxu0
        %v1177 = vadd.f32 %v317, %v1176
        %v1178 = vpop.f32.mrf.mxu0
        %v1179 = vadd.f32 %v317, %v1178
        %1180 = vmatmul.bf16.gmra.mxu0 %v859
        %v1181 = vpop.f32.mrf.mxu0
        %v1182 = vadd.f32 %v317, %v1181
        %v1183 = vpop.f32.mrf.mxu0
        %v1184 = vadd.f32 %v317, %v1183
        %1185 = vmatmul.bf16.gmra.mxu0 %v862
        %v1186 = vpop.f32.mrf.mxu0
        %v1187 = vadd.f32 %v317, %v1186
        %v1188 = vpop.f32.mrf.mxu0
        %v1189 = vadd.f32 %v317, %v1188
        %1190 = vmatmul.bf16.gmra.mxu0 %v865
        %v1191 = vpop.f32.mrf.mxu0
        %v1192 = vadd.f32 %v317, %v1191
        %v1193 = vpop.f32.mrf.mxu0
        %v1194 = vadd.f32 %v317, %v1193
        %1195 = vmatmul.bf16.gmra.mxu0 %v868
        %v1196 = vpop.f32.mrf.mxu0
        %v1197 = vadd.f32 %v317, %v1196
        %v1198 = vpop.f32.mrf.mxu0
        %v1199 = vadd.f32 %v317, %v1198
        %1200 = vmatmul.bf16.gmra.mxu0 %v871
        %v1201 = vpop.f32.mrf.mxu0
        %v1202 = vadd.f32 %v317, %v1201
        %v1203 = vpop.f32.mrf.mxu0
        %v1204 = vadd.f32 %v317, %v1203
        %1205 = vdwg.mxu0
        %1206 = vst [vmem:[%s164] sm:$0xff] %v887
        %1207 = vst [vmem:[%s164 + $0x8] sm:$0xff] %v889
        %1208 = vst [vmem:[%s164 + $0x10] sm:$0xff] %v892
        %1209 = vst [vmem:[%s164 + $0x18] sm:$0xff] %v894
        %1210 = vst [vmem:[%s164 + $0x20] sm:$0xff] %v897
        %1211 = vst [vmem:[%s164 + $0x28] sm:$0xff] %v899
        %1212 = vst [vmem:[%s164 + $0x30] sm:$0xff] %v902
        %1213 = vst [vmem:[%s164 + $0x38] sm:$0xff] %v904
        %1214 = vst [vmem:[%s164 + $0x40] sm:$0xff] %v907
        %1215 = vst [vmem:[%s164 + $0x48] sm:$0xff] %v909
        %1216 = vst [vmem:[%s164 + $0x50] sm:$0xff] %v912
        %1217 = vst [vmem:[%s164 + $0x58] sm:$0xff] %v914
        %1218 = vst [vmem:[%s164 + $0x60] sm:$0xff] %v917
        %1219 = vst [vmem:[%s164 + $0x68] sm:$0xff] %v919
        %1220 = vst [vmem:[%s164 + $0x70] sm:$0xff] %v922
        %1221 = vst [vmem:[%s164 + $0x78] sm:$0xff] %v924
        %1222 = vst [vmem:[%s164 + $0x80] sm:$0xff] %v927
        %1223 = vst [vmem:[%s164 + $0x88] sm:$0xff] %v929
        %1224 = vst [vmem:[%s164 + $0x90] sm:$0xff] %v932
        %1225 = vst [vmem:[%s164 + $0x98] sm:$0xff] %v934
        %1226 = vst [vmem:[%s164 + $0xa0] sm:$0xff] %v937
        %1227 = vst [vmem:[%s164 + $0xa8] sm:$0xff] %v939
        %1228 = vst [vmem:[%s164 + $0xb0] sm:$0xff] %v942
        %1229 = vst [vmem:[%s164 + $0xb8] sm:$0xff] %v944
        %1230 = vst [vmem:[%s164 + $0xc0] sm:$0xff] %v947
        %1231 = vst [vmem:[%s164 + $0xc8] sm:$0xff] %v949
        %1232 = vst [vmem:[%s164 + $0xd0] sm:$0xff] %v952
        %1233 = vst [vmem:[%s164 + $0xd8] sm:$0xff] %v954
        %1234 = vst [vmem:[%s164 + $0xe0] sm:$0xff] %v957
        %1235 = vst [vmem:[%s164 + $0xe8] sm:$0xff] %v959
        %1236 = vst [vmem:[%s164 + $0xf0] sm:$0xff] %v962
        %1237 = vst [vmem:[%s164 + $0xf8] sm:$0xff] %v964
        %1238 = vst [vmem:[%s164 + $0x100] sm:$0xff] %v967
        %1239 = vst [vmem:[%s164 + $0x108] sm:$0xff] %v969
        %1240 = vst [vmem:[%s164 + $0x110] sm:$0xff] %v972
        %1241 = vst [vmem:[%s164 + $0x118] sm:$0xff] %v974
        %1242 = vst [vmem:[%s164 + $0x120] sm:$0xff] %v977
        %1243 = vst [vmem:[%s164 + $0x128] sm:$0xff] %v979
        %1244 = vst [vmem:[%s164 + $0x130] sm:$0xff] %v982
        %1245 = vst [vmem:[%s164 + $0x138] sm:$0xff] %v984
        %1246 = vst [vmem:[%s164 + $0x140] sm:$0xff] %v987
        %1247 = vst [vmem:[%s164 + $0x148] sm:$0xff] %v989
        %1248 = vst [vmem:[%s164 + $0x150] sm:$0xff] %v992
        %1249 = vst [vmem:[%s164 + $0x158] sm:$0xff] %v994
        %1250 = vst [vmem:[%s164 + $0x160] sm:$0xff] %v997
        %1251 = vst [vmem:[%s164 + $0x168] sm:$0xff] %v999
        %1252 = vst [vmem:[%s164 + $0x170] sm:$0xff] %v1002
        %1253 = vst [vmem:[%s164 + $0x178] sm:$0xff] %v1004
        %1254 = vst [vmem:[%s164 + $0x180] sm:$0xff] %v1007
        %1255 = vst [vmem:[%s164 + $0x188] sm:$0xff] %v1009
        %1256 = vst [vmem:[%s164 + $0x190] sm:$0xff] %v1012
        %1257 = vst [vmem:[%s164 + $0x198] sm:$0xff] %v1014
        %1258 = vst [vmem:[%s164 + $0x1a0] sm:$0xff] %v1017
        %1259 = vst [vmem:[%s164 + $0x1a8] sm:$0xff] %v1019
        %1260 = vst [vmem:[%s164 + $0x1b0] sm:$0xff] %v1022
        %1261 = vst [vmem:[%s164 + $0x1b8] sm:$0xff] %v1024
        %1262 = vst [vmem:[%s164 + $0x1c0] sm:$0xff] %v1027
        %1263 = vst [vmem:[%s164 + $0x1c8] sm:$0xff] %v1029
        %1264 = vst [vmem:[%s164 + $0x1d0] sm:$0xff] %v1032
        %1265 = vst [vmem:[%s164 + $0x1d8] sm:$0xff] %v1034
        %1266 = vst [vmem:[%s164 + $0x1e0] sm:$0xff] %v1037
        %1267 = vst [vmem:[%s164 + $0x1e8] sm:$0xff] %v1039
        %1268 = vst [vmem:[%s164 + $0x1f0] sm:$0xff] %v1042
        %1269 = vst [vmem:[%s164 + $0x1f8] sm:$0xff] %v1044
        %1270 = vst [vmem:[%s164 + $0x200] sm:$0xff] %v1047
        %1271 = vst [vmem:[%s164 + $0x208] sm:$0xff] %v1049
        %1272 = vst [vmem:[%s164 + $0x210] sm:$0xff] %v1052
        %1273 = vst [vmem:[%s164 + $0x218] sm:$0xff] %v1054
        %1274 = vst [vmem:[%s164 + $0x220] sm:$0xff] %v1057
        %1275 = vst [vmem:[%s164 + $0x228] sm:$0xff] %v1059
        %1276 = vst [vmem:[%s164 + $0x230] sm:$0xff] %v1062
        %1277 = vst [vmem:[%s164 + $0x238] sm:$0xff] %v1064
        %1278 = vst [vmem:[%s164 + $0x240] sm:$0xff] %v1067
        %1279 = vst [vmem:[%s164 + $0x248] sm:$0xff] %v1069
        %1280 = vst [vmem:[%s164 + $0x250] sm:$0xff] %v1072
        %1281 = vst [vmem:[%s164 + $0x258] sm:$0xff] %v1074
        %1282 = vst [vmem:[%s164 + $0x260] sm:$0xff] %v1077
        %1283 = vst [vmem:[%s164 + $0x268] sm:$0xff] %v1079
        %1284 = vst [vmem:[%s164 + $0x270] sm:$0xff] %v1082
        %1285 = vst [vmem:[%s164 + $0x278] sm:$0xff] %v1084
        %1286 = vst [vmem:[%s164 + $0x280] sm:$0xff] %v1087
        %1287 = vst [vmem:[%s164 + $0x288] sm:$0xff] %v1089
        %1288 = vst [vmem:[%s164 + $0x290] sm:$0xff] %v1092
        %1289 = vst [vmem:[%s164 + $0x298] sm:$0xff] %v1094
        %1290 = vst [vmem:[%s164 + $0x2a0] sm:$0xff] %v1097
        %1291 = vst [vmem:[%s164 + $0x2a8] sm:$0xff] %v1099
        %1292 = vst [vmem:[%s164 + $0x2b0] sm:$0xff] %v1102
        %1293 = vst [vmem:[%s164 + $0x2b8] sm:$0xff] %v1104
        %1294 = vst [vmem:[%s164 + $0x2c0] sm:$0xff] %v1107
        %1295 = vst [vmem:[%s164 + $0x2c8] sm:$0xff] %v1109
        %1296 = vst [vmem:[%s164 + $0x2d0] sm:$0xff] %v1112
        %1297 = vst [vmem:[%s164 + $0x2d8] sm:$0xff] %v1114
        %1298 = vst [vmem:[%s164 + $0x2e0] sm:$0xff] %v1117
        %1299 = vst [vmem:[%s164 + $0x2e8] sm:$0xff] %v1119
        %1300 = vst [vmem:[%s164 + $0x2f0] sm:$0xff] %v1122
        %1301 = vst [vmem:[%s164 + $0x2f8] sm:$0xff] %v1124
        %1302 = vst [vmem:[%s164 + $0x300] sm:$0xff] %v1127
        %1303 = vst [vmem:[%s164 + $0x308] sm:$0xff] %v1129
        %1304 = vst [vmem:[%s164 + $0x310] sm:$0xff] %v1132
        %1305 = vst [vmem:[%s164 + $0x318] sm:$0xff] %v1134
        %1306 = vst [vmem:[%s164 + $0x320] sm:$0xff] %v1137
        %1307 = vst [vmem:[%s164 + $0x328] sm:$0xff] %v1139
        %1308 = vst [vmem:[%s164 + $0x330] sm:$0xff] %v1142
        %1309 = vst [vmem:[%s164 + $0x338] sm:$0xff] %v1144
        %1310 = vst [vmem:[%s164 + $0x340] sm:$0xff] %v1147
        %1311 = vst [vmem:[%s164 + $0x348] sm:$0xff] %v1149
        %1312 = vst [vmem:[%s164 + $0x350] sm:$0xff] %v1152
        %1313 = vst [vmem:[%s164 + $0x358] sm:$0xff] %v1154
        %1314 = vst [vmem:[%s164 + $0x360] sm:$0xff] %v1157
        %1315 = vst [vmem:[%s164 + $0x368] sm:$0xff] %v1159
        %1316 = vst [vmem:[%s164 + $0x370] sm:$0xff] %v1162
        %1317 = vst [vmem:[%s164 + $0x378] sm:$0xff] %v1164
        %1318 = vst [vmem:[%s164 + $0x380] sm:$0xff] %v1167
        %1319 = vst [vmem:[%s164 + $0x388] sm:$0xff] %v1169
        %1320 = vst [vmem:[%s164 + $0x390] sm:$0xff] %v1172
        %1321 = vst [vmem:[%s164 + $0x398] sm:$0xff] %v1174
        %1322 = vst [vmem:[%s164 + $0x3a0] sm:$0xff] %v1177
        %1323 = vst [vmem:[%s164 + $0x3a8] sm:$0xff] %v1179
        %1324 = vst [vmem:[%s164 + $0x3b0] sm:$0xff] %v1182
        %1325 = vst [vmem:[%s164 + $0x3b8] sm:$0xff] %v1184
        %1326 = vst [vmem:[%s164 + $0x3c0] sm:$0xff] %v1187
        %1327 = vst [vmem:[%s164 + $0x3c8] sm:$0xff] %v1189
        %1328 = vst [vmem:[%s164 + $0x3d0] sm:$0xff] %v1192
        %1329 = vst [vmem:[%s164 + $0x3d8] sm:$0xff] %v1194
        %1330 = vst [vmem:[%s164 + $0x3e0] sm:$0xff] %v1197
        %1331 = vst [vmem:[%s164 + $0x3e8] sm:$0xff] %v1199
        %1332 = vst [vmem:[%s164 + $0x3f0] sm:$0xff] %v1202
        %1333 = vst [vmem:[%s164 + $0x3f8] sm:$0xff] %v1204
        %s1334 = sand.u32 %s93, 1
        %s1335 = scalar_lea.sflag [#allocation3], %s1334
        %s1336 = sand.u32 %s93, 1
        %s1337 = smul.addr %s1336, 1024
        %s1338 = scalar_lea.vmem [#allocation2], %s1337
        // Predicated region
        $region33: #{tpu_custom_call.1} parent=31 // pred_check
          %p1339 = pneg %p103
        $region34: #{tpu_custom_call.1} parent=31 // pred_check_branch
          %1341 = sbr.rel (%p1339) target = $region36
        $region35: #{tpu_custom_call.1} parent=31 // pred_region
          %s1342 = smul.u32 128, %s17
          %1344 = vsyncadd %s1335, 0
          %s1345 = smul.addr %s1342, 8
          %s1346 = scalar_lea.hbm %s3, %s1345
          %s1347 = sshll.u32 %s1338, 4
          %s1348 = int_to_ptr.vmem [resolvable:$true] %s1347
          %s1349 = sshll.u32 %s1346, 4
          %s1350 = int_to_ptr.hbm [resolvable:$true] %s1349
          %1355 = dma.vmem_to_hbm [thread:$0]  %s1348, 16384, %s1350, %s1335, 128, 128, 8
        $region36: #{tpu_custom_call.1} parent=31 // pred_fallthru
          _
      $region32: #{tpu_custom_call.1} parent=5 // pred_fallthru
        _
      %p1356 = scmp.le.s32.totalorder 2, %s12
      // Predicated region
      $region37: #{tpu_custom_call.1} parent=5 // pred_check
        %p1357 = pneg %p1356
      $region38: #{tpu_custom_call.1} parent=5 // pred_check_branch
        %1359 = sbr.rel (%p1357) target = $region40
      $region39: #{tpu_custom_call.1} parent=5 // pred_region
        %s1360 = ssub.s32 %s12, 2
        // Predicated region
        $region41: #{tpu_custom_call.1} parent=39 // pred_check
          %p1361 = pneg %p109
        $region42: #{tpu_custom_call.1} parent=39 // pred_check_branch
          %1363 = sbr.rel (%p1361) target = $region44
        $region43: #{tpu_custom_call.1} parent=39 // pred_region
          %s1364 = sand.u32 %s94, 1
          %s1365 = scalar_lea.sflag [#allocation3], %s1364
          %s1366 = sand.u32 %s94, 1
          %s1367 = smul.addr %s1366, 1024
          %s1368 = scalar_lea.vmem [#allocation2], %s1367
          %1370 = dma.done %s1365, 16384
        $region44: #{tpu_custom_call.1} parent=39 // pred_fallthru
          _
      $region40: #{tpu_custom_call.1} parent=5 // pred_fallthru
        _
    $region6: #{tpu_custom_call.1} parent=1 // loop_footer
      %s16 = sadd.s32 1, %s12
    $region7: #{tpu_custom_call.1} parent=1 // loop_footer_branch
      %11 = sbr.rel target = $region3
    $region8: #{tpu_custom_call.1} parent=1 // loop_exit
      _
    %1371 = vsyncpa [#allocation3], 1
    %s1372 = scalar_lea.sflag [#allocation3], 1
    %1373 = vsyncpa %s1372, 1

</llo_original>
